<compile_context>
chip_gen: v7x
topology: tpu7x:2x2x1
jax: 0.10.0
libtpu: 0.0.40
codegen_flags: <defaults>
</compile_context>

<pallas_src>
import jax
import jax.numpy as jnp
from jax.experimental import pallas as pl
from jax.experimental.pallas import tpu as pltpu


def _round_up(x: int, m: int) -> int:
    return (x + m - 1) // m * m


def meta_embedding_kernel(x_ref, meta_ref, wx_ref, wm_ref, b_ref, out_ref):
    # metadata = metadata.float() (module semantics), then the fused affine map.
    meta = meta_ref[...].astype(jnp.float32)
    out = (jnp.dot(x_ref[...], wx_ref[...], preferred_element_type=jnp.float32)
           + jnp.dot(meta, wm_ref[...], preferred_element_type=jnp.float32)
           + b_ref[...])
    out_ref[...] = out.astype(out_ref.dtype)


def meta_embedding_forward(x, metadata, params, *, tm=512):
    """params: wf (d_in, d_feat), bf (d_feat,), wm (meta_in, meta_out),
    bm (meta_out,), wc (d_feat + meta_out, d_out), bc (d_out,)."""
    wf, bf = params["wf"], params["bf"]
    wm, bm = params["wm"], params["bm"]
    wc, bc = params["wc"], params["bc"]

    d_in, d_features = wf.shape
    meta_in = wm.shape[0]
    d_out = wc.shape[1]

    # classifier weight split over the virtual concat([feat, meta_emb]):
    wcf = wc[:d_features]          # (d_feat, d_out)
    wcm = wc[d_features:]          # (meta_out, d_out)

    # Fold the affine chain once, outside the kernel (all f32, exact to ~ulp).
    wx_fused = wf @ wcf                            # (d_in, d_out)
    wm_fused = wm @ wcm                            # (meta_in, d_out)
    b_fused = bf @ wcf + bm @ wcm + bc             # (d_out,)

    # Lane-dense output: pad the output dim to a multiple of 128.
    d_out_p = _round_up(max(d_out, 128), 128)
    pad_n = d_out_p - d_out
    wx_fused = jnp.pad(wx_fused, ((0, 0), (0, pad_n)))
    wm_fused = jnp.pad(wm_fused, ((0, 0), (0, pad_n)))
    b_fused = jnp.pad(b_fused, (0, pad_n)).reshape(1, d_out_p)

    # Batch tiling: tile rows must be a multiple of 8 sublanes for f32.
    batch = x.shape[0]
    tm_eff = max(8, min(tm, _round_up(batch, 8)))
    batch_p = _round_up(batch, tm_eff)
    if batch_p != batch:
        x = jnp.pad(x, ((0, batch_p - batch), (0, 0)))
        metadata = jnp.pad(metadata, ((0, batch_p - batch), (0, 0)))

    grid = (batch_p // tm_eff,)

    flops = 2 * batch_p * (d_in + meta_in) * d_out_p
    bytes_accessed = (
        batch_p * d_in * x.dtype.itemsize
        + batch_p * meta_in * metadata.dtype.itemsize
        + (wx_fused.size + wm_fused.size + b_fused.size) * 4
        + batch_p * d_out_p * 4)

    out_p = pl.pallas_call(
        meta_embedding_kernel,
        out_shape=jax.ShapeDtypeStruct((batch_p, d_out_p), jnp.float32),
        grid_spec=pltpu.PrefetchScalarGridSpec(
            num_scalar_prefetch=0,
            grid=grid,
            in_specs=[
                # activations: tiled along the batch (grid) axis
                pl.BlockSpec((tm_eff, d_in), lambda i: (i, 0)),
                pl.BlockSpec((tm_eff, meta_in), lambda i: (i, 0)),
                # fused weights / bias: VMEM-resident across all grid steps
                pl.BlockSpec((d_in, d_out_p), lambda i: (0, 0)),
                pl.BlockSpec((meta_in, d_out_p), lambda i: (0, 0)),
                pl.BlockSpec((1, d_out_p), lambda i: (0, 0)),
            ],
            out_specs=pl.BlockSpec((tm_eff, d_out_p), lambda i: (i, 0)),
        ),
        compiler_params=pltpu.CompilerParams(
            dimension_semantics=("parallel",),
            vmem_limit_bytes=32 * 1024 * 1024,
        ),
        cost_estimate=pl.CostEstimate(
            flops=flops, transcendentals=0, bytes_accessed=bytes_accessed),
    )(x, metadata, wx_fused, wm_fused, b_fused)

    # Strip batch and lane padding outside the kernel.
    return out_p[:batch, :d_out]


def reference_forward(x, metadata, params):
    feat = x @ params["wf"] + params["bf"]
    meta_emb = metadata.astype(jnp.float32) @ params["wm"] + params["bm"]
    cat = jnp.concatenate([feat, meta_emb], axis=-1)
    return cat @ params["wc"] + params["bc"]


if __name__ == "__main__":
    # Small shapes consistent with the module's forward.
    d_in = 32          # featurizer input dim
    d_features = 64    # classifier.in_features
    meta_in = 8
    meta_out = 16
    d_out = 10         # classifier.out_features

    key = jax.random.PRNGKey(0)
    k = jax.random.split(key, 9)

    params = {
        "wf": jax.random.normal(k[2], (d_in, d_features), jnp.float32) * 0.1,
        "bf": jax.random.normal(k[3], (d_features,), jnp.float32) * 0.1,
        "wm": jax.random.normal(k[4], (meta_in, meta_out), jnp.float32) * 0.1,
        "bm": jax.random.normal(k[5], (meta_out,), jnp.float32) * 0.1,
        "wc": jax.random.normal(k[6], (d_features + meta_out, d_out), jnp.float32) * 0.1,
        "bc": jax.random.normal(k[7], (d_out,), jnp.float32) * 0.1,
    }

    # Case 1: tiny batch (single grid step).
    batch = 8
    x = jax.random.normal(k[0], (batch, d_in), dtype=jnp.float32)
    metadata = jax.random.randint(k[1], (batch, meta_in), 0, 5, dtype=jnp.int32)

    out = jax.block_until_ready(meta_embedding_forward(x, metadata, params))
    ref = reference_forward(x, metadata, params)
    assert out.shape == (batch, d_out)
    assert jnp.allclose(out, ref, atol=1e-4, rtol=1e-4), "mismatch vs reference (batch=8)"

    # Case 2: batch not divisible by the tile / by 8 -> exercises padding.
    batch2 = 300
    x2 = jax.random.normal(k[8], (batch2, d_in), dtype=jnp.float32)
    metadata2 = jax.random.randint(k[1], (batch2, meta_in), 0, 5, dtype=jnp.int32)

    out2 = jax.block_until_ready(meta_embedding_forward(x2, metadata2, params))
    ref2 = reference_forward(x2, metadata2, params)
    assert out2.shape == (batch2, d_out)
    assert jnp.allclose(out2, ref2, atol=1e-4, rtol=1e-4), "mismatch vs reference (batch=300)"

    # Case 3: multi-step grid (batch > tile) to exercise pipelining.
    batch3 = 1536
    x3 = jax.random.normal(k[8], (batch3, d_in), dtype=jnp.float32)
    metadata3 = jax.random.randint(k[1], (batch3, meta_in), 0, 5, dtype=jnp.int32)

    out3 = jax.block_until_ready(meta_embedding_forward(x3, metadata3, params))
    ref3 = reference_forward(x3, metadata3, params)
    assert out3.shape == (batch3, d_out)
    assert jnp.allclose(out3, ref3, atol=1e-4, rtol=1e-4), "mismatch vs reference (batch=1536)"

    print("KERNEL_OK")
</pallas_src>

<mosaic_0001>
module attributes {stable_mosaic.version = 11 : i64} {
  func.func @meta_embedding_kernel(%arg0: i32, %arg1: memref<8x32xf32, #tpu.memory_space<vmem>>, %arg2: memref<8x8xi32, #tpu.memory_space<vmem>>, %arg3: memref<32x128xf32, #tpu.memory_space<vmem>>, %arg4: memref<8x128xf32, #tpu.memory_space<vmem>>, %arg5: memref<1x128xf32, #tpu.memory_space<vmem>>, %arg6: memref<8x128xf32, #tpu.memory_space<vmem>>) attributes {dimension_semantics = [#tpu.dimension_semantics<parallel>], iteration_bounds = array<i64: 1>, scalar_prefetch = 0 : i64, scratch_operands = 0 : i64, tpu.core_type = #tpu.core_type<tc>, window_params = [{transform_indices = @transform_0, window_bounds = array<i64: 8, 32>}, {transform_indices = @transform_1, window_bounds = array<i64: 8, 8>}, {pipeline_mode = #tpu.pipeline_mode<synchronous>, transform_indices = @transform_2, window_bounds = array<i64: 32, 128>}, {pipeline_mode = #tpu.pipeline_mode<synchronous>, transform_indices = @transform_3, window_bounds = array<i64: 8, 128>}, {pipeline_mode = #tpu.pipeline_mode<synchronous>, transform_indices = @transform_4, window_bounds = array<i64: 1, 128>}, {transform_indices = @transform_5, window_bounds = array<i64: 8, 128>}]} {
    %c0 = arith.constant 0 : index
    %c0_0 = arith.constant 0 : index
    %0 = vector.load %arg2[%c0, %c0_0] : memref<8x8xi32, #tpu.memory_space<vmem>>, vector<8x8xi32>
    %1 = arith.sitofp %0 : vector<8x8xi32> to vector<8x8xf32>
    %c0_1 = arith.constant 0 : index
    %c0_2 = arith.constant 0 : index
    %2 = vector.load %arg1[%c0_1, %c0_2] : memref<8x32xf32, #tpu.memory_space<vmem>>, vector<8x32xf32>
    %c0_3 = arith.constant 0 : index
    %c0_4 = arith.constant 0 : index
    %3 = vector.load %arg3[%c0_3, %c0_4] : memref<32x128xf32, #tpu.memory_space<vmem>>, vector<32x128xf32>
    %cst = arith.constant dense<0.000000e+00> : vector<8x128xf32>
    %4 = tpu.matmul %2, %3, %cst {dimension_numbers = #tpu.dot_dimension_numbers<[1], [0], [0], [1], [0, 0, 1, 1], [], []>} : vector<8x32xf32>, vector<32x128xf32>, vector<8x128xf32> -> vector<8x128xf32>
    %c0_5 = arith.constant 0 : index
    %c0_6 = arith.constant 0 : index
    %5 = vector.load %arg4[%c0_5, %c0_6] : memref<8x128xf32, #tpu.memory_space<vmem>>, vector<8x128xf32>
    %cst_7 = arith.constant dense<0.000000e+00> : vector<8x128xf32>
    %6 = tpu.matmul %1, %5, %cst_7 {dimension_numbers = #tpu.dot_dimension_numbers<[1], [0], [0], [1], [0, 0, 1, 1], [], []>} : vector<8x8xf32>, vector<8x128xf32>, vector<8x128xf32> -> vector<8x128xf32>
    %7 = arith.addf %4, %6 : vector<8x128xf32>
    %c0_8 = arith.constant 0 : index
    %c0_9 = arith.constant 0 : index
    %8 = vector.load %arg5[%c0_8, %c0_9] : memref<1x128xf32, #tpu.memory_space<vmem>>, vector<1x128xf32>
    %9 = vector.broadcast %8 : vector<1x128xf32> to vector<8x128xf32>
    %10 = arith.addf %7, %9 : vector<8x128xf32>
    %c0_10 = arith.constant 0 : index
    %c0_11 = arith.constant 0 : index
    %11 = vector.load %arg6[%c0_10, %c0_11] : memref<8x128xf32, #tpu.memory_space<vmem>>, vector<8x128xf32>
    tpu.vector_store %arg6[%c0_10, %c0_11], %10 {strides = array<i32>} : memref<8x128xf32, #tpu.memory_space<vmem>>, vector<8x128xf32>,
    return
  }
  func.func @transform_0(%arg0: i32) -> (i32, i32) {
    %c0_i32 = arith.constant 0 : i32
    %c0_i32_0 = arith.constant 0 : i32
    return %arg0, %c0_i32 : i32, i32
  }
  func.func @transform_1(%arg0: i32) -> (i32, i32) {
    %c0_i32 = arith.constant 0 : i32
    %c0_i32_0 = arith.constant 0 : i32
    return %arg0, %c0_i32 : i32, i32
  }
  func.func @transform_2(%arg0: i32) -> (i32, i32) {
    %c0_i32 = arith.constant 0 : i32
    %c0_i32_0 = arith.constant 0 : i32
    %c0_i32_1 = arith.constant 0 : i32
    return %c0_i32, %c0_i32_0 : i32, i32
  }
  func.func @transform_3(%arg0: i32) -> (i32, i32) {
    %c0_i32 = arith.constant 0 : i32
    %c0_i32_0 = arith.constant 0 : i32
    %c0_i32_1 = arith.constant 0 : i32
    return %c0_i32, %c0_i32_0 : i32, i32
  }
  func.func @transform_4(%arg0: i32) -> (i32, i32) {
    %c0_i32 = arith.constant 0 : i32
    %c0_i32_0 = arith.constant 0 : i32
    %c0_i32_1 = arith.constant 0 : i32
    return %c0_i32, %c0_i32_0 : i32, i32
  }
  func.func @transform_5(%arg0: i32) -> (i32, i32) {
    %c0_i32 = arith.constant 0 : i32
    %c0_i32_0 = arith.constant 0 : i32
    return %arg0, %c0_i32 : i32, i32
  }
}

</mosaic_0001>

<llo_original>
// kernel: tpu_custom_call.1
$region0: #{tpu_custom_call.1}
  #allocation0 [shape = 'u32[]', space=smem, size = 0x4, offset = 0x4, fixed_abs, tag = 'smem constant byte address 0x4 - core index']
  #allocation1 [shape = 'u32[144,128]{1,0:T(1,128)}', space=vmem, size = 0x12000, scoped, tag = 'internal scratch']
  %s0 = inlined_call_operand.hbm [shape: f32[8,32], index: 0, kind: input, shape index: {}]
  %s1 = inlined_call_operand.hbm [shape: s32[8,8], index: 1, kind: input, shape index: {}]
  %s2 = inlined_call_operand.hbm [shape: f32[32,128], index: 2, kind: input, shape index: {}]
  %s3 = inlined_call_operand.vmem [shape: f32[8,128], index: 3, kind: input, shape index: {}]
  %s4 = inlined_call_operand.vmem [shape: f32[1,128], index: 4, kind: input, shape index: {}]
  %s5 = inlined_call_operand.hbm [shape: f32[8,128], index: 5, kind: output, shape index: {}]
  %s6 = sld [smem:[#allocation0]]
  $region42: #{tpu_custom_call.1} parent=0
    _
  %s8 = ssub.s32 1, %s6
  %s9 = scalar_select 0, %s8, %s6
  $region1: #{tpu_custom_call.1} parent=0
    #allocation2 [shape = 'u8[4096]{0}', space=vmem, size = 0x1000, scoped, tag = 'input window, operand 0, single buffered']
    #allocation3 [shape = 's32[1]{0}', space=sflag, size = 0x4, scoped, tag = 'scoped memory for tpu_custom_call.1']
    #allocation4 [shape = 's32[1]{0}', space=sflag, size = 0x4, scoped, tag = 'scoped memory for tpu_custom_call.1']
    #allocation5 [shape = 'u8[4096]{0}', space=vmem, size = 0x1000, scoped, tag = 'input window, operand 1, single buffered']
    #allocation6 [shape = 's32[1]{0}', space=sflag, size = 0x4, scoped, tag = 'scoped memory for tpu_custom_call.1']
    #allocation7 [shape = 'u8[16384]{0}', space=vmem, size = 0x4000, scoped, tag = 'input window, operand 2, single buffered']
    #allocation8 [shape = 'u8[4096]{0}', space=vmem, size = 0x1000, scoped, tag = 'output window, operand 0, single buffered']
    %10 = vsyncpa [#allocation3], 0
    %11 = vsyncpa [#allocation6], 0
    %12 = vsyncpa [#allocation4], 0
    // Predicated region
    $region2: #{tpu_custom_call.1} parent=1 // pred_check
      _
    $region3: #{tpu_custom_call.1} parent=1 // pred_check_branch
      %14 = sbr.rel (0) target = $region5
    $region4: #{tpu_custom_call.1} parent=1 // pred_region
      %s16 = ssub.s32 128, 128
      %17 = vsyncadd [#allocation3], %s16
      %s19 = sshll.u32 [#allocation2], 4
      %s20 = int_to_ptr.vmem [resolvable:$true] %s19
      %22 = dma.hbm_to_vmem [thread:$0]  %s0, 128, %s20, [#allocation3]
    $region5: #{tpu_custom_call.1} parent=1 // pred_fallthru
      _
    // Predicated region
    $region6: #{tpu_custom_call.1} parent=1 // pred_check
      _
    $region7: #{tpu_custom_call.1} parent=1 // pred_check_branch
      %24 = sbr.rel (0) target = $region9
    $region8: #{tpu_custom_call.1} parent=1 // pred_region
      %s26 = ssub.s32 128, 128
      %27 = vsyncadd [#allocation6], %s26
      %s29 = sshll.u32 [#allocation5], 4
      %s30 = int_to_ptr.vmem [resolvable:$true] %s29
      %32 = dma.hbm_to_vmem [thread:$0]  %s1, 128, %s30, [#allocation6]
    $region9: #{tpu_custom_call.1} parent=1 // pred_fallthru
      _
    // Predicated region
    $region10: #{tpu_custom_call.1} parent=1 // pred_check
      _
    $region11: #{tpu_custom_call.1} parent=1 // pred_check_branch
      %34 = sbr.rel (0) target = $region13
    $region12: #{tpu_custom_call.1} parent=1 // pred_region
      %s36 = ssub.s32 512, 512
      %37 = vsyncadd [#allocation6], %s36
      %s38 = sshll.u32 [#allocation7], 4
      %s39 = int_to_ptr.vmem [resolvable:$true] %s38
      %44 = dma.hbm_to_vmem [thread:$0]  %s2, 512, %s39, [#allocation6], 128, 128, 8
    $region13: #{tpu_custom_call.1} parent=1 // pred_fallthru
      _
    // Predicated region
    $region14: #{tpu_custom_call.1} parent=1 // pred_check
      _
    $region15: #{tpu_custom_call.1} parent=1 // pred_check_branch
      %46 = sbr.rel (0) target = $region17
    $region16: #{tpu_custom_call.1} parent=1 // pred_region
      _
    $region17: #{tpu_custom_call.1} parent=1 // pred_fallthru
      _
    // Predicated region
    $region18: #{tpu_custom_call.1} parent=1 // pred_check
      _
    $region19: #{tpu_custom_call.1} parent=1 // pred_check_branch
      %48 = sbr.rel (0) target = $region21
    $region20: #{tpu_custom_call.1} parent=1 // pred_region
      _
    $region21: #{tpu_custom_call.1} parent=1 // pred_fallthru
      _
    // Predicated region
    $region22: #{tpu_custom_call.1} parent=1 // pred_check
      _
    $region23: #{tpu_custom_call.1} parent=1 // pred_check_branch
      %50 = sbr.rel (0) target = $region25
    $region24: #{tpu_custom_call.1} parent=1 // pred_region
      %51 = dma.done [#allocation3], 128
    $region25: #{tpu_custom_call.1} parent=1 // pred_fallthru
      _
    // Predicated region
    $region26: #{tpu_custom_call.1} parent=1 // pred_check
      _
    $region27: #{tpu_custom_call.1} parent=1 // pred_check_branch
      %53 = sbr.rel (0) target = $region29
    $region28: #{tpu_custom_call.1} parent=1 // pred_region
      %54 = dma.done [#allocation6], 128
    $region29: #{tpu_custom_call.1} parent=1 // pred_fallthru
      _
    // Predicated region
    $region30: #{tpu_custom_call.1} parent=1 // pred_check
      _
    $region31: #{tpu_custom_call.1} parent=1 // pred_check_branch
      %56 = sbr.rel (0) target = $region33
    $region32: #{tpu_custom_call.1} parent=1 // pred_region
      %57 = dma.done [#allocation6], 512
    $region33: #{tpu_custom_call.1} parent=1 // pred_fallthru
      _
    %v58 = vld [vmem:[#allocation5] sm:$0xff]
    %v59 = vcvt.s32.f32 %v58
    %v60 = vld [vmem:[#allocation2] sm:$0xff]
    %v61 = vld [vmem:[#allocation7] sm:$0xff]
    %v62 = vld [vmem:[#allocation7 + $0x8] sm:$0xff]
    %v63 = vld [vmem:[#allocation7 + $0x10] sm:$0xff]
    %v64 = vld [vmem:[#allocation7 + $0x18] sm:$0xff]
    %v65 = vld [vmem:[%s3] sm:$0xff]
    %vm66 = vcmask 64512
    %v68 = vsel %vm66, %v59, 0
    %70 = vmatprep.subr.mxu0 0.0
    %71 = vmatpush1.msra.mxu0 %v65
    %72 = vmatprep.subr.mxu0 0.0
    %73 = vmatpush1.msra.mxu0 0.0
    %74 = vmatprep.subr.mxu0 0.0
    %75 = vmatpush1.msra.mxu0 0.0
    %76 = vmatprep.subr.mxu0 0.0
    %77 = vmatpush1.msra.mxu0 0.0
    %78 = vmatprep.subr.mxu0 0.0
    %79 = vmatpush1.msra.mxu0 0.0
    %80 = vmatprep.subr.mxu0 0.0
    %81 = vmatpush1.msra.mxu0 0.0
    %82 = vmatprep.subr.mxu0 0.0
    %83 = vmatpush1.msra.mxu0 0.0
    %84 = vmatprep.subr.mxu0 0.0
    %85 = vmatpush1.msra.mxu0 0.0
    %86 = vmatprep.subr.mxu0 0.0
    %87 = vmatpush1.msra.mxu0 0.0
    %88 = vmatprep.subr.mxu0 0.0
    %89 = vmatpush1.msra.mxu0 0.0
    %90 = vmatprep.subr.mxu0 0.0
    %91 = vmatpush1.msra.mxu0 0.0
    %92 = vmatprep.subr.mxu0 0.0
    %93 = vmatpush1.msra.mxu0 0.0
    %94 = vmatprep.subr.mxu0 0.0
    %95 = vmatpush1.msra.mxu0 0.0
    %96 = vmatprep.subr.mxu0 0.0
    %97 = vmatpush1.msra.mxu0 0.0
    %98 = vmatprep.subr.mxu0 0.0
    %99 = vmatpush1.msra.mxu0 0.0
    %100 = vmatprep.subr.mxu0 0.0
    %101 = vmatpush1.msra.mxu0 0.0
    %102 = vmatprep.subr.mxu0 0.0
    %103 = vmatpush1.msra.mxu0 0.0
    %104 = vmatprep.subr.mxu0 0.0
    %105 = vmatpush1.msra.mxu0 0.0
    %106 = vmatprep.subr.mxu0 0.0
    %107 = vmatpush1.msra.mxu0 0.0
    %108 = vmatprep.subr.mxu0 0.0
    %109 = vmatpush1.msra.mxu0 0.0
    %110 = vmatprep.subr.mxu0 0.0
    %111 = vmatpush1.msra.mxu0 0.0
    %112 = vmatprep.subr.mxu0 0.0
    %113 = vmatpush1.msra.mxu0 0.0
    %114 = vmatprep.subr.mxu0 0.0
    %115 = vmatpush1.msra.mxu0 0.0
    %116 = vmatprep.subr.mxu0 0.0
    %117 = vmatpush1.msra.mxu0 0.0
    %118 = vmatprep.subr.mxu0 0.0
    %119 = vmatpush1.msra.mxu0 0.0
    %120 = vmatprep.subr.mxu0 0.0
    %121 = vmatpush1.msra.mxu0 0.0
    %122 = vmatprep.subr.mxu0 0.0
    %123 = vmatpush1.msra.mxu0 0.0
    %124 = vmatprep.subr.mxu0 0.0
    %125 = vmatpush1.msra.mxu0 0.0
    %126 = vmatprep.subr.mxu0 0.0
    %127 = vmatpush1.msra.mxu0 0.0
    %128 = vmatprep.subr.mxu0 0.0
    %129 = vmatpush1.msra.mxu0 0.0
    %130 = vmatprep.subr.mxu0 0.0
    %131 = vmatpush1.msra.mxu0 0.0
    %132 = vmatprep.subr.mxu0 0.0
    %133 = vmatpush1.msra.mxu0 0.0
    %134 = vmatprep.mubr.f32.mxu0 0.0
    %135 = vmatmul.mubr.f32.gmra.mrb[0].mxu0 %v68
    %v136 = vpop.f32.mrb[0].mxu0
    %v137 = vadd.f32 0.0, %v136
    %v138 = vpop.f32.mrb[0].mxu0
    %139 = vdwg.mxu0
    %vm140 = vcmask 261120
    %v142 = vsel %vm140, %v60, 0
    %144 = vmatprep.subr.mxu0 0.0
    %145 = vmatpush1.msra.mxu0 %v61
    %146 = vmatprep.subr.mxu0 0.0
    %147 = vmatpush1.msra.mxu0 %v62
    %148 = vmatprep.subr.mxu0 0.0
    %149 = vmatpush1.msra.mxu0 %v63
    %150 = vmatprep.subr.mxu0 0.0
    %151 = vmatpush1.msra.mxu0 %v64
    %152 = vmatprep.subr.mxu0 0.0
    %153 = vmatpush1.msra.mxu0 0.0
    %154 = vmatprep.subr.mxu0 0.0
    %155 = vmatpush1.msra.mxu0 0.0
    %156 = vmatprep.subr.mxu0 0.0
    %157 = vmatpush1.msra.mxu0 0.0
    %158 = vmatprep.subr.mxu0 0.0
    %159 = vmatpush1.msra.mxu0 0.0
    %160 = vmatprep.subr.mxu0 0.0
    %161 = vmatpush1.msra.mxu0 0.0
    %162 = vmatprep.subr.mxu0 0.0
    %163 = vmatpush1.msra.mxu0 0.0
    %164 = vmatprep.subr.mxu0 0.0
    %165 = vmatpush1.msra.mxu0 0.0
    %166 = vmatprep.subr.mxu0 0.0
    %167 = vmatpush1.msra.mxu0 0.0
    %168 = vmatprep.subr.mxu0 0.0
    %169 = vmatpush1.msra.mxu0 0.0
    %170 = vmatprep.subr.mxu0 0.0
    %171 = vmatpush1.msra.mxu0 0.0
    %172 = vmatprep.subr.mxu0 0.0
    %173 = vmatpush1.msra.mxu0 0.0
    %174 = vmatprep.subr.mxu0 0.0
    %175 = vmatpush1.msra.mxu0 0.0
    %176 = vmatprep.subr.mxu0 0.0
    %177 = vmatpush1.msra.mxu0 0.0
    %178 = vmatprep.subr.mxu0 0.0
    %179 = vmatpush1.msra.mxu0 0.0
    %180 = vmatprep.subr.mxu0 0.0
    %181 = vmatpush1.msra.mxu0 0.0
    %182 = vmatprep.subr.mxu0 0.0
    %183 = vmatpush1.msra.mxu0 0.0
    %184 = vmatprep.subr.mxu0 0.0
    %185 = vmatpush1.msra.mxu0 0.0
    %186 = vmatprep.subr.mxu0 0.0
    %187 = vmatpush1.msra.mxu0 0.0
    %188 = vmatprep.subr.mxu0 0.0
    %189 = vmatpush1.msra.mxu0 0.0
    %190 = vmatprep.subr.mxu0 0.0
    %191 = vmatpush1.msra.mxu0 0.0
    %192 = vmatprep.subr.mxu0 0.0
    %193 = vmatpush1.msra.mxu0 0.0
    %194 = vmatprep.subr.mxu0 0.0
    %195 = vmatpush1.msra.mxu0 0.0
    %196 = vmatprep.subr.mxu0 0.0
    %197 = vmatpush1.msra.mxu0 0.0
    %198 = vmatprep.subr.mxu0 0.0
    %199 = vmatpush1.msra.mxu0 0.0
    %200 = vmatprep.subr.mxu0 0.0
    %201 = vmatpush1.msra.mxu0 0.0
    %202 = vmatprep.subr.mxu0 0.0
    %203 = vmatpush1.msra.mxu0 0.0
    %204 = vmatprep.subr.mxu0 0.0
    %205 = vmatpush1.msra.mxu0 0.0
    %206 = vmatprep.subr.mxu0 0.0
    %207 = vmatpush1.msra.mxu0 0.0
    %208 = vmatprep.mubr.f32.mxu0 0.0
    %209 = vmatmul.mubr.f32.gmra.mrb[0].mxu0 %v142
    %v210 = vpop.f32.mrb[0].mxu0
    %v211 = vadd.f32 %v137, %v210
    %v212 = vpop.f32.mrb[0].mxu0
    %213 = vdwg.mxu0
    %v214 = vld [vmem:[%s4] sm:$0x1]
    %v216 = vlaneseq
    %v217 = vshrl.u32 %v216, 7
    %v218 = vsub.s32 0, %v217
    %v219 = vrot.slane %v214, %v218
    %v221 = vadd.f32 %v211, %v219
    %222 = vst [vmem:[#allocation8] sm:$0xff] %v221
    // Predicated region
    $region34: #{tpu_custom_call.1} parent=1 // pred_check
      _
    $region35: #{tpu_custom_call.1} parent=1 // pred_check_branch
      %224 = sbr.rel (0) target = $region37
    $region36: #{tpu_custom_call.1} parent=1 // pred_region
      %s226 = ssub.s32 128, 128
      %227 = vsyncadd [#allocation4], %s226
      %s229 = sshll.u32 [#allocation8], 4
      %s230 = int_to_ptr.vmem [resolvable:$true] %s229
      %232 = dma.vmem_to_hbm [thread:$0]  %s230, 128, %s5, [#allocation4]
    $region37: #{tpu_custom_call.1} parent=1 // pred_fallthru
      _
    // Predicated region
    $region38: #{tpu_custom_call.1} parent=1 // pred_check
      _
    $region39: #{tpu_custom_call.1} parent=1 // pred_check_branch
      %234 = sbr.rel (0) target = $region41
    $region40: #{tpu_custom_call.1} parent=1 // pred_region
      %235 = dma.done [#allocation4], 128
    $region41: #{tpu_custom_call.1} parent=1 // pred_fallthru
      _
    %236 = vsyncpa [#allocation3], 1
    %237 = vsyncpa [#allocation6], 1
    %238 = vsyncpa [#allocation4], 1

</llo_original>
